<compile_context>
chip_gen: v5e
topology: v5e:2x2
jax: 0.10.0
libtpu: 0.0.40
codegen_flags: <defaults>
</compile_context>

<pallas_src>
import math
import numpy as np
import jax
import jax.numpy as jnp
from jax.experimental import pallas as pl
from jax.experimental.pallas import tpu as pltpu


# ----------------------------- kernel -----------------------------

def _rope_freq_kernel(posT_ref, w_ref, out_ref):
    # posT_ref: (K8, TM)  folded positions, transposed, + ones row + zero pad rows
    # w_ref:    (K8, Lk)  block-diagonal interleaved omegas + phase row
    # out_ref:  (TM, Lk)  interleaved cos/sin (lane-dense, Lk % 128 == 0)
    ang = jax.lax.dot_general(
        posT_ref[...], w_ref[...],
        dimension_numbers=(((0,), (0,)), ((), ())),     # contract sublane (K) dims
        preferred_element_type=jnp.float32,
        precision=jax.lax.Precision.HIGHEST,            # f32-accurate MXU emulation
    )
    # sin(x) == cos(x - pi/2): one EUP pass emits the interleaved cos/sin lanes.
    out_ref[...] = jnp.cos(ang)


# ----------------------------- host-side tables -----------------------------

def _round_up(x, m):
    return (x + m - 1) // m * m


def _interleaved_omega(dim_sizes, theta):
    """W2 (R, 2H): omega duplicated on cos/sin lanes; phase (2H,)."""
    half = [d // 2 for d in dim_sizes]
    H = sum(half)
    R = len(dim_sizes)
    W2 = np.zeros((R, 2 * H), dtype=np.float64)
    off = 0
    for i, d in enumerate(dim_sizes):
        assert d % 2 == 0, "dim must be even"
        scale = np.arange(0, d, 2, dtype=np.float64) / d
        omega = 1.0 / theta ** scale                       # (d//2,)
        cols = 2 * (off + np.arange(d // 2))
        W2[i, cols] = omega                                # cos lanes
        W2[i, cols + 1] = omega                            # sin lanes
        off += d // 2
    phase = np.zeros((2 * H,), dtype=np.float64)
    phase[1::2] = -np.pi / 2.0                             # sin(x) = cos(x - pi/2)
    return W2, phase, H


def _folded_table(W2, phase, k, K8):
    """Block-diagonal fold of k logical rows per physical row + phase row + zero pad."""
    R, L = W2.shape
    C = k * R
    Wf = np.zeros((K8, k * L), dtype=np.float64)
    for g in range(k):
        Wf[g * R:(g + 1) * R, g * L:(g + 1) * L] = W2      # omegas
        Wf[C, g * L:(g + 1) * L] = phase                   # phase row (hit by ones column)
    return jnp.asarray(Wf.astype(np.float32))


# ----------------------------- module -----------------------------

class RoPEFrequency:
    """JAX/Pallas port of the PyTorch RoPEFrequency module."""

    _LANE = 128
    _TM_HARD_CAP = 4096          # rows per grid step upper bound
    _SPLIT_THRESHOLD = 2048      # below this (folded rows) a single grid step wins
    _OUT_BUF_BYTES = 4 << 20     # ~4 MiB output tile budget per buffer

    def __init__(self, dim_sizes, theta):
        self.dim_sizes = list(dim_sizes)
        self.theta = float(theta)
        self._R = len(self.dim_sizes)

        W2, phase, H = _interleaved_omega(self.dim_sizes, self.theta)
        self._H = H
        two_h = 2 * H
        # Fold factor so the stored last dim k*2H is a multiple of 128 lanes
        # (always achievable: 2H is even, so k = 128/gcd(2H,128) <= 64).
        self._k = self._LANE // math.gcd(two_h, self._LANE)
        self._Lk = self._k * two_h
        self._C = self._k * self._R
        self._K8 = _round_up(self._C + 1, 8)               # + ones row, sublane-aligned
        self._W = _folded_table(W2, phase, self._k, self._K8)   # (K8, Lk) f32

    # ---- position-index helpers (host-side, same as the torch module) ----
    def get_image_position_indices(self, height, width, y_index=1, x_index=2):
        rope_dim = self._R
        pos = np.zeros((height // 2, width // 2, rope_dim), dtype=np.float32)
        pos[..., y_index] += np.arange(height // 2, dtype=np.float32)[:, None]
        pos[..., x_index] += np.arange(width // 2, dtype=np.float32)[None, :]
        return jnp.asarray(pos.reshape(-1, rope_dim))

    def get_text_position_indices(self, seq_len):
        return jnp.zeros((seq_len, self._R), dtype=jnp.float32)

    # ---- tiling ----
    def _choose_tile(self, Nf_min):
        lane = self._LANE
        tm_budget = max(lane, (self._OUT_BUF_BYTES // (4 * self._Lk)) // lane * lane)
        tm_cap = min(self._TM_HARD_CAP, tm_budget)
        if Nf_min <= min(tm_cap, self._SPLIT_THRESHOLD):
            tm = Nf_min                                    # single step, zero row padding
        else:
            steps = max(2, pl.cdiv(Nf_min, tm_cap))        # >=2 steps (v7x megacore)
            tm = _round_up(pl.cdiv(Nf_min, steps), lane)   # lane-aligned tile
        steps = pl.cdiv(Nf_min, tm)
        return tm, steps

    # ---- forward ----
    def __call__(self, position_indices):
        return self.forward(position_indices)

    def forward(self, position_indices):
        pos = jnp.asarray(position_indices, dtype=jnp.float32)
        assert pos.ndim == 2 and pos.shape[-1] == self._R
        N, R = pos.shape
        assert N >= 1
        H, k, C, K8, Lk = self._H, self._k, self._C, self._K8, self._Lk

        Nf_min = pl.cdiv(N, k)
        TM, steps = self._choose_tile(Nf_min)
        Nf = steps * TM
        N_pad = Nf * k

        # Pad N (zero rows -> cos=1/sin=0, sliced off), fold k rows per physical
        # row, transpose to lane-dense (C, Nf), append ones row (phase) + zero pad.
        pos_pad = jnp.pad(pos, ((0, N_pad - N), (0, 0)))
        posT = pos_pad.reshape(Nf, C).T                               # (C, Nf)
        posT1 = jnp.concatenate(
            [posT,
             jnp.ones((1, Nf), jnp.float32),
             jnp.zeros((K8 - C - 1, Nf), jnp.float32)], axis=0)       # (K8, Nf)

        cost = pl.CostEstimate(
            flops=2 * Nf * K8 * Lk,
            transcendentals=Nf * Lk,
            bytes_accessed=4 * (K8 * Nf + K8 * Lk + Nf * Lk),
        )

        out = pl.pallas_call(
            _rope_freq_kernel,
            out_shape=jax.ShapeDtypeStruct((Nf, Lk), jnp.float32),
            grid_spec=pltpu.PrefetchScalarGridSpec(
                num_scalar_prefetch=0,
                grid=(steps,),
                in_specs=[
                    pl.BlockSpec((K8, TM), lambda i: (0, i)),   # pos (lane-dense)
                    pl.BlockSpec((K8, Lk), lambda i: (0, 0)),   # W, resident
                ],
                out_specs=pl.BlockSpec((TM, Lk), lambda i: (i, 0)),
            ),
            compiler_params=pltpu.CompilerParams(
                dimension_semantics=("parallel",)),
            cost_estimate=cost,
        )(posT1, self._W)

        # (Nf, k*2H) -> (N_pad, H, 2): free row-major view; slice off padding rows.
        return out.reshape(N_pad, H, 2)[:N]


# ----------------------------- reference & test -----------------------------

def _reference(pos, dim_sizes, theta):
    """Pure-numpy reference matching the PyTorch code (f64 internals)."""
    pos = np.asarray(pos, dtype=np.float64)
    blocks = []
    for i, d in enumerate(dim_sizes):
        scale = np.arange(0, d, 2, dtype=np.float64) / d
        omega = 1.0 / theta ** scale
        angles = np.outer(pos[:, i], omega)
        blocks.append(np.stack([np.cos(angles), np.sin(angles)], axis=-1))
    return np.concatenate(blocks, axis=-2).astype(np.float32)


if __name__ == "__main__":
    key = jax.random.PRNGKey(0)

    # ---- main case: 2H = 64 -> fold k=2 -> 128-lane stores ----
    dim_sizes = [16, 24, 24]
    theta = 10000.0
    module = RoPEFrequency(dim_sizes, theta)

    pos_img = module.get_image_position_indices(16, 16)          # (64, 3)
    pos = pos_img + 0.01 * jax.random.normal(key, pos_img.shape, dtype=jnp.float32)

    freqs = jax.block_until_ready(module(pos))
    ref = _reference(np.asarray(pos), dim_sizes, theta)
    assert freqs.shape == ref.shape == (64, 32, 2), freqs.shape
    assert freqs.dtype == jnp.float32
    np.testing.assert_allclose(np.asarray(freqs), ref, rtol=5e-5, atol=5e-5)

    # ---- N not divisible by the fold factor -> padded internally, still lane-dense ----
    pos_odd = 3.0 * jax.random.normal(jax.random.PRNGKey(1), (7, 3), dtype=jnp.float32)
    freqs_odd = jax.block_until_ready(module(pos_odd))
    ref_odd = _reference(np.asarray(pos_odd), dim_sizes, theta)
    np.testing.assert_allclose(np.asarray(freqs_odd), ref_odd, rtol=5e-5, atol=5e-5)

    # ---- text path (all-zero positions) ----
    txt = jax.block_until_ready(module(module.get_text_position_indices(8)))
    assert txt.shape == (8, 32, 2)
    np.testing.assert_allclose(np.asarray(txt)[..., 0], 1.0, atol=1e-6)
    np.testing.assert_allclose(np.asarray(txt)[..., 1], 0.0, atol=1e-6)

    # ---- awkward head dim: 2H = 72 -> fold k=16 -> 1152-lane stores ----
    dim_sizes2 = [24, 24, 24]
    module2 = RoPEFrequency(dim_sizes2, theta)
    pos2 = 2.0 * jax.random.normal(jax.random.PRNGKey(2), (10, 3), dtype=jnp.float32)
    freqs2 = jax.block_until_ready(module2(pos2))
    ref2 = _reference(np.asarray(pos2), dim_sizes2, theta)
    assert freqs2.shape == ref2.shape == (10, 36, 2)
    np.testing.assert_allclose(np.asarray(freqs2), ref2, rtol=5e-5, atol=5e-5)

    print("KERNEL_OK")
</pallas_src>

<mosaic_0001>
module attributes {stable_mosaic.version = 11 : i64} {
  func.func @_rope_freq_kernel(%arg0: i32, %arg1: memref<8x32xf32, #tpu.memory_space<vmem>>, %arg2: memref<8x128xf32, #tpu.memory_space<vmem>>, %arg3: memref<32x128xf32, #tpu.memory_space<vmem>>) attributes {dimension_semantics = [#tpu.dimension_semantics<parallel>], iteration_bounds = array<i64: 1>, scalar_prefetch = 0 : i64, scratch_operands = 0 : i64, tpu.core_type = #tpu.core_type<tc>, window_params = [{transform_indices = @transform_0, window_bounds = array<i64: 8, 32>}, {pipeline_mode = #tpu.pipeline_mode<synchronous>, transform_indices = @transform_1, window_bounds = array<i64: 8, 128>}, {transform_indices = @transform_2, window_bounds = array<i64: 32, 128>}]} {
    %c0 = arith.constant 0 : index
    %c0_0 = arith.constant 0 : index
    %0 = vector.load %arg1[%c0, %c0_0] : memref<8x32xf32, #tpu.memory_space<vmem>>, vector<8x32xf32>
    %c0_1 = arith.constant 0 : index
    %c0_2 = arith.constant 0 : index
    %1 = vector.load %arg2[%c0_1, %c0_2] : memref<8x128xf32, #tpu.memory_space<vmem>>, vector<8x128xf32>
    %cst = arith.constant dense<0.000000e+00> : vector<32x128xf32>
    %2 = tpu.matmul %0, %1, %cst {dimension_numbers = #tpu.dot_dimension_numbers<[0], [0], [1], [1], [0, 1, 1, 1], [], []>, precision = #tpu.contract_precision<fp32>} : vector<8x32xf32>, vector<8x128xf32>, vector<32x128xf32> -> vector<32x128xf32>
    %3 = math.cos %2 : vector<32x128xf32>
    %c0_3 = arith.constant 0 : index
    %c0_4 = arith.constant 0 : index
    %4 = vector.load %arg3[%c0_3, %c0_4] : memref<32x128xf32, #tpu.memory_space<vmem>>, vector<32x128xf32>
    tpu.vector_store %arg3[%c0_3, %c0_4], %3 {strides = array<i32>} : memref<32x128xf32, #tpu.memory_space<vmem>>, vector<32x128xf32>,
    return
  }
  func.func @transform_0(%arg0: i32) -> (i32, i32) {
    %c0_i32 = arith.constant 0 : i32
    %c0_i32_0 = arith.constant 0 : i32
    return %c0_i32, %arg0 : i32, i32
  }
  func.func @transform_1(%arg0: i32) -> (i32, i32) {
    %c0_i32 = arith.constant 0 : i32
    %c0_i32_0 = arith.constant 0 : i32
    %c0_i32_1 = arith.constant 0 : i32
    return %c0_i32, %c0_i32_0 : i32, i32
  }
  func.func @transform_2(%arg0: i32) -> (i32, i32) {
    %c0_i32 = arith.constant 0 : i32
    %c0_i32_0 = arith.constant 0 : i32
    return %arg0, %c0_i32 : i32, i32
  }
}

</mosaic_0001>

<llo_original>
// kernel: tpu_custom_call.1
$region0: #{tpu_custom_call.1}
  #allocation0 [shape = 'u32[]', space=smem, size = 0x4, offset = 0x4, fixed_abs, tag = 'smem constant byte address 0x4 - core index']
  #allocation1 [shape = 'u32[72,128]{1,0:T(1,128)}', space=vmem, size = 0x9000, scoped, tag = 'internal scratch']
  %s0 = inlined_call_operand.hbm [shape: f32[8,32], index: 0, kind: input, shape index: {}]
  %s1 = inlined_call_operand.hbm [shape: f32[8,128], index: 1, kind: input, shape index: {}]
  %s2 = inlined_call_operand.hbm [shape: f32[32,128], index: 2, kind: output, shape index: {}]
  %s3 = sld [smem:[#allocation0]]
  $region26: #{tpu_custom_call.1} parent=0
    _
  %s5 = ssub.s32 1, %s3
  %s6 = scalar_select 0, %s5, %s3
  $region1: #{tpu_custom_call.1} parent=0
    #allocation2 [shape = 'u8[4096]{0}', space=vmem, size = 0x1000, scoped, tag = 'input window, operand 0, single buffered']
    #allocation3 [shape = 's32[1]{0}', space=sflag, size = 0x4, scoped, tag = 'scoped memory for tpu_custom_call.1']
    #allocation4 [shape = 's32[1]{0}', space=sflag, size = 0x4, scoped, tag = 'scoped memory for tpu_custom_call.1']
    #allocation5 [shape = 'u8[4096]{0}', space=vmem, size = 0x1000, scoped, tag = 'input window, operand 1, single buffered']
    #allocation6 [shape = 's32[1]{0}', space=sflag, size = 0x4, scoped, tag = 'scoped memory for tpu_custom_call.1']
    #allocation7 [shape = 'u8[16384]{0}', space=vmem, size = 0x4000, scoped, tag = 'output window, operand 0, single buffered']
    %7 = vsyncpa [#allocation3], 0
    %8 = vsyncpa [#allocation6], 0
    %9 = vsyncpa [#allocation4], 0
    // Predicated region
    $region2: #{tpu_custom_call.1} parent=1 // pred_check
      _
    $region3: #{tpu_custom_call.1} parent=1 // pred_check_branch
      %11 = sbr.rel (0) target = $region5
    $region4: #{tpu_custom_call.1} parent=1 // pred_region
      %13 = vsyncadd [#allocation3], 0
      %s15 = sshll.u32 %s0, 4
      %s16 = int_to_ptr.hbm [resolvable:$true] %s15
      %s17 = sshll.u32 [#allocation2], 4
      %s18 = int_to_ptr.vmem [resolvable:$true] %s17
      %20 = dma.hbm_to_vmem [thread:$0]  %s16, 128, %s18, [#allocation3]
    $region5: #{tpu_custom_call.1} parent=1 // pred_fallthru
      _
    // Predicated region
    $region6: #{tpu_custom_call.1} parent=1 // pred_check
      _
    $region7: #{tpu_custom_call.1} parent=1 // pred_check_branch
      %22 = sbr.rel (0) target = $region9
    $region8: #{tpu_custom_call.1} parent=1 // pred_region
      %24 = vsyncadd [#allocation6], 0
      %s26 = sshll.u32 %s1, 4
      %s27 = int_to_ptr.hbm [resolvable:$true] %s26
      %s28 = sshll.u32 [#allocation5], 4
      %s29 = int_to_ptr.vmem [resolvable:$true] %s28
      %31 = dma.hbm_to_vmem [thread:$0]  %s27, 128, %s29, [#allocation6]
    $region9: #{tpu_custom_call.1} parent=1 // pred_fallthru
      _
    // Predicated region
    $region10: #{tpu_custom_call.1} parent=1 // pred_check
      _
    $region11: #{tpu_custom_call.1} parent=1 // pred_check_branch
      %33 = sbr.rel (0) target = $region13
    $region12: #{tpu_custom_call.1} parent=1 // pred_region
      %35 = dma.done [#allocation3], 128
    $region13: #{tpu_custom_call.1} parent=1 // pred_fallthru
      _
    // Predicated region
    $region14: #{tpu_custom_call.1} parent=1 // pred_check
      _
    $region15: #{tpu_custom_call.1} parent=1 // pred_check_branch
      %37 = sbr.rel (0) target = $region17
    $region16: #{tpu_custom_call.1} parent=1 // pred_region
      %39 = dma.done [#allocation6], 128
    $region17: #{tpu_custom_call.1} parent=1 // pred_fallthru
      _
    %v40 = vld [vmem:[#allocation2] sm:$0xff]
    %v41 = vld [vmem:[#allocation5] sm:$0xff]
    %42 = vxpose.xlu0.b32.start [1/16] %v40, 128
    %43 = vxpose.xlu0.b32.cont [2/16] 0.0, 128
    %44 = vxpose.xlu0.b32.cont [3/16] 0.0, 128
    %45 = vxpose.xlu0.b32.cont [4/16] 0.0, 128
    %46 = vxpose.xlu0.b32.cont [5/16] 0.0, 128
    %47 = vxpose.xlu0.b32.cont [6/16] 0.0, 128
    %48 = vxpose.xlu0.b32.cont [7/16] 0.0, 128
    %49 = vxpose.xlu0.b32.cont [8/16] 0.0, 128
    %50 = vxpose.xlu0.b32.cont [9/16] 0.0, 128
    %51 = vxpose.xlu0.b32.cont [10/16] 0.0, 128
    %52 = vxpose.xlu0.b32.cont [11/16] 0.0, 128
    %53 = vxpose.xlu0.b32.cont [12/16] 0.0, 128
    %54 = vxpose.xlu0.b32.cont [13/16] 0.0, 128
    %55 = vxpose.xlu0.b32.cont [14/16] 0.0, 128
    %56 = vxpose.xlu0.b32.cont [15/16] 0.0, 128
    %57 = vxpose.xlu0.b32.end [16/16] 0.0, 128
    %v58 = vpop.trf.xlu0
    %v59 = vpop.trf.xlu0
    %v60 = vpop.trf.xlu0
    %v61 = vpop.trf.xlu0
    %v62 = vpop.trf.xlu0
    %v63 = vpop.trf.xlu0
    %v64 = vpop.trf.xlu0
    %v65 = vpop.trf.xlu0
    %v66 = vpop.trf.xlu0
    %v67 = vpop.trf.xlu0
    %v68 = vpop.trf.xlu0
    %v69 = vpop.trf.xlu0
    %v70 = vpop.trf.xlu0
    %v71 = vpop.trf.xlu0
    %v72 = vpop.trf.xlu0
    %v73 = vpop.trf.xlu0
    %vm74 = vcmask 64512
    %v76 = vsel %vm74, %v58, 0
    %v79 = vsel %vm74, %v59, 0
    %v82 = vsel %vm74, %v60, 0
    %v85 = vsel %vm74, %v61, 0
    %87 = vmatpush.msra.mxu0 0.0
    %88 = vmatpush.msra.mxu0 0.0
    %89 = vmatpush.msra.mxu0 0.0
    %90 = vmatpush.msra.mxu0 0.0
    %91 = vmatpush.msra.mxu0 0.0
    %92 = vmatpush.msra.mxu0 0.0
    %93 = vmatpush.msra.mxu0 0.0
    %94 = vmatpush.msra.mxu0 0.0
    %95 = vmatpush.msra.mxu0 0.0
    %96 = vmatpush.msra.mxu0 0.0
    %97 = vmatpush.msra.mxu0 0.0
    %98 = vmatpush.msra.mxu0 0.0
    %99 = vmatpush.msra.mxu0 0.0
    %100 = vmatpush.msra.mxu0 0.0
    %101 = vmatpush.msra.mxu0 0.0
    %v102 = vand.u32 %v41, 4294901760
    %103 = vmatpush.msra.mxu0 %v102
    %v104 = vand.u32 %v76, 4294901760
    %v105 = vsub.f32 %v76, %v104
    %v106 = vand.u32 %v105, 4294901760
    %v107 = vsub.f32 %v105, %v106
    %v108 = vand.u32 %v107, 4294901760
    %109 = vmatmul.f32.gmra.mxu0 %v108
    %v110 = vpop.f32.mrf.mxu0
    %v111 = vadd.f32 0.0, %v110
    %v112 = vand.u32 %v79, 4294901760
    %v113 = vsub.f32 %v79, %v112
    %v114 = vand.u32 %v113, 4294901760
    %v115 = vsub.f32 %v113, %v114
    %v116 = vand.u32 %v115, 4294901760
    %117 = vmatmul.f32.gmra.mxu0 %v116
    %v118 = vpop.f32.mrf.mxu0
    %v119 = vadd.f32 0.0, %v118
    %v120 = vand.u32 %v82, 4294901760
    %v121 = vsub.f32 %v82, %v120
    %v122 = vand.u32 %v121, 4294901760
    %v123 = vsub.f32 %v121, %v122
    %v124 = vand.u32 %v123, 4294901760
    %125 = vmatmul.f32.gmra.mxu0 %v124
    %v126 = vpop.f32.mrf.mxu0
    %v127 = vadd.f32 0.0, %v126
    %v128 = vand.u32 %v85, 4294901760
    %v129 = vsub.f32 %v85, %v128
    %v130 = vand.u32 %v129, 4294901760
    %v131 = vsub.f32 %v129, %v130
    %v132 = vand.u32 %v131, 4294901760
    %133 = vmatmul.f32.gmra.mxu0 %v132
    %v134 = vpop.f32.mrf.mxu0
    %v135 = vadd.f32 0.0, %v134
    %136 = vdwg.mxu0
    %137 = vmatpush.msra.mxu0 0.0
    %138 = vmatpush.msra.mxu0 0.0
    %139 = vmatpush.msra.mxu0 0.0
    %140 = vmatpush.msra.mxu0 0.0
    %141 = vmatpush.msra.mxu0 0.0
    %142 = vmatpush.msra.mxu0 0.0
    %143 = vmatpush.msra.mxu0 0.0
    %144 = vmatpush.msra.mxu0 0.0
    %145 = vmatpush.msra.mxu0 0.0
    %146 = vmatpush.msra.mxu0 0.0
    %147 = vmatpush.msra.mxu0 0.0
    %148 = vmatpush.msra.mxu0 0.0
    %149 = vmatpush.msra.mxu0 0.0
    %150 = vmatpush.msra.mxu0 0.0
    %151 = vmatpush.msra.mxu0 0.0
    %v152 = vand.u32 %v41, 4294901760
    %v153 = vsub.f32 %v41, %v152
    %v154 = vand.u32 %v153, 4294901760
    %v155 = vsub.f32 %v153, %v154
    %v156 = vand.u32 %v155, 4294901760
    %157 = vmatpush.msra.mxu0 %v156
    %v158 = vand.u32 %v76, 4294901760
    %159 = vmatmul.f32.gmra.mxu0 %v158
    %v160 = vpop.f32.mrf.mxu0
    %v161 = vadd.f32 %v111, %v160
    %v162 = vand.u32 %v79, 4294901760
    %163 = vmatmul.f32.gmra.mxu0 %v162
    %v164 = vpop.f32.mrf.mxu0
    %v165 = vadd.f32 %v119, %v164
    %v166 = vand.u32 %v82, 4294901760
    %167 = vmatmul.f32.gmra.mxu0 %v166
    %v168 = vpop.f32.mrf.mxu0
    %v169 = vadd.f32 %v127, %v168
    %v170 = vand.u32 %v85, 4294901760
    %171 = vmatmul.f32.gmra.mxu0 %v170
    %v172 = vpop.f32.mrf.mxu0
    %v173 = vadd.f32 %v135, %v172
    %174 = vdwg.mxu0
    %175 = vmatpush.msra.mxu0 0.0
    %176 = vmatpush.msra.mxu0 0.0
    %177 = vmatpush.msra.mxu0 0.0
    %178 = vmatpush.msra.mxu0 0.0
    %179 = vmatpush.msra.mxu0 0.0
    %180 = vmatpush.msra.mxu0 0.0
    %181 = vmatpush.msra.mxu0 0.0
    %182 = vmatpush.msra.mxu0 0.0
    %183 = vmatpush.msra.mxu0 0.0
    %184 = vmatpush.msra.mxu0 0.0
    %185 = vmatpush.msra.mxu0 0.0
    %186 = vmatpush.msra.mxu0 0.0
    %187 = vmatpush.msra.mxu0 0.0
    %188 = vmatpush.msra.mxu0 0.0
    %189 = vmatpush.msra.mxu0 0.0
    %v190 = vand.u32 %v41, 4294901760
    %v191 = vsub.f32 %v41, %v190
    %192 = vmatpush.msra.mxu0 %v191
    %v193 = vand.u32 %v76, 4294901760
    %v194 = vsub.f32 %v76, %v193
    %195 = vmatmul.f32.gmra.mxu0 %v194
    %v196 = vpop.f32.mrf.mxu0
    %v197 = vadd.f32 %v161, %v196
    %v198 = vand.u32 %v79, 4294901760
    %v199 = vsub.f32 %v79, %v198
    %200 = vmatmul.f32.gmra.mxu0 %v199
    %v201 = vpop.f32.mrf.mxu0
    %v202 = vadd.f32 %v165, %v201
    %v203 = vand.u32 %v82, 4294901760
    %v204 = vsub.f32 %v82, %v203
    %205 = vmatmul.f32.gmra.mxu0 %v204
    %v206 = vpop.f32.mrf.mxu0
    %v207 = vadd.f32 %v169, %v206
    %v208 = vand.u32 %v85, 4294901760
    %v209 = vsub.f32 %v85, %v208
    %210 = vmatmul.f32.gmra.mxu0 %v209
    %v211 = vpop.f32.mrf.mxu0
    %v212 = vadd.f32 %v173, %v211
    %213 = vdwg.mxu0
    %214 = vmatpush.msra.mxu0 0.0
    %215 = vmatpush.msra.mxu0 0.0
    %216 = vmatpush.msra.mxu0 0.0
    %217 = vmatpush.msra.mxu0 0.0
    %218 = vmatpush.msra.mxu0 0.0
    %219 = vmatpush.msra.mxu0 0.0
    %220 = vmatpush.msra.mxu0 0.0
    %221 = vmatpush.msra.mxu0 0.0
    %222 = vmatpush.msra.mxu0 0.0
    %223 = vmatpush.msra.mxu0 0.0
    %224 = vmatpush.msra.mxu0 0.0
    %225 = vmatpush.msra.mxu0 0.0
    %226 = vmatpush.msra.mxu0 0.0
    %227 = vmatpush.msra.mxu0 0.0
    %228 = vmatpush.msra.mxu0 0.0
    %v229 = vand.u32 %v41, 4294901760
    %230 = vmatpush.msra.mxu0 %v229
    %v231 = vand.u32 %v76, 4294901760
    %v232 = vsub.f32 %v76, %v231
    %v233 = vand.u32 %v232, 4294901760
    %234 = vmatmul.f32.gmra.mxu0 %v233
    %v235 = vpop.f32.mrf.mxu0
    %v236 = vadd.f32 %v197, %v235
    %v237 = vand.u32 %v79, 4294901760
    %v238 = vsub.f32 %v79, %v237
    %v239 = vand.u32 %v238, 4294901760
    %240 = vmatmul.f32.gmra.mxu0 %v239
    %v241 = vpop.f32.mrf.mxu0
    %v242 = vadd.f32 %v202, %v241
    %v243 = vand.u32 %v82, 4294901760
    %v244 = vsub.f32 %v82, %v243
    %v245 = vand.u32 %v244, 4294901760
    %246 = vmatmul.f32.gmra.mxu0 %v245
    %v247 = vpop.f32.mrf.mxu0
    %v248 = vadd.f32 %v207, %v247
    %v249 = vand.u32 %v85, 4294901760
    %v250 = vsub.f32 %v85, %v249
    %v251 = vand.u32 %v250, 4294901760
    %252 = vmatmul.f32.gmra.mxu0 %v251
    %v253 = vpop.f32.mrf.mxu0
    %v254 = vadd.f32 %v212, %v253
    %255 = vdwg.mxu0
    %256 = vmatpush.msra.mxu0 0.0
    %257 = vmatpush.msra.mxu0 0.0
    %258 = vmatpush.msra.mxu0 0.0
    %259 = vmatpush.msra.mxu0 0.0
    %260 = vmatpush.msra.mxu0 0.0
    %261 = vmatpush.msra.mxu0 0.0
    %262 = vmatpush.msra.mxu0 0.0
    %263 = vmatpush.msra.mxu0 0.0
    %264 = vmatpush.msra.mxu0 0.0
    %265 = vmatpush.msra.mxu0 0.0
    %266 = vmatpush.msra.mxu0 0.0
    %267 = vmatpush.msra.mxu0 0.0
    %268 = vmatpush.msra.mxu0 0.0
    %269 = vmatpush.msra.mxu0 0.0
    %270 = vmatpush.msra.mxu0 0.0
    %v271 = vand.u32 %v41, 4294901760
    %v272 = vsub.f32 %v41, %v271
    %v273 = vand.u32 %v272, 4294901760
    %274 = vmatpush.msra.mxu0 %v273
    %v275 = vand.u32 %v76, 4294901760
    %276 = vmatmul.f32.gmra.mxu0 %v275
    %v277 = vpop.f32.mrf.mxu0
    %v278 = vadd.f32 %v236, %v277
    %v279 = vand.u32 %v79, 4294901760
    %280 = vmatmul.f32.gmra.mxu0 %v279
    %v281 = vpop.f32.mrf.mxu0
    %v282 = vadd.f32 %v242, %v281
    %v283 = vand.u32 %v82, 4294901760
    %284 = vmatmul.f32.gmra.mxu0 %v283
    %v285 = vpop.f32.mrf.mxu0
    %v286 = vadd.f32 %v248, %v285
    %v287 = vand.u32 %v85, 4294901760
    %288 = vmatmul.f32.gmra.mxu0 %v287
    %v289 = vpop.f32.mrf.mxu0
    %v290 = vadd.f32 %v254, %v289
    %291 = vdwg.mxu0
    %292 = vmatpush.msra.mxu0 0.0
    %293 = vmatpush.msra.mxu0 0.0
    %294 = vmatpush.msra.mxu0 0.0
    %295 = vmatpush.msra.mxu0 0.0
    %296 = vmatpush.msra.mxu0 0.0
    %297 = vmatpush.msra.mxu0 0.0
    %298 = vmatpush.msra.mxu0 0.0
    %299 = vmatpush.msra.mxu0 0.0
    %300 = vmatpush.msra.mxu0 0.0
    %301 = vmatpush.msra.mxu0 0.0
    %302 = vmatpush.msra.mxu0 0.0
    %303 = vmatpush.msra.mxu0 0.0
    %304 = vmatpush.msra.mxu0 0.0
    %305 = vmatpush.msra.mxu0 0.0
    %306 = vmatpush.msra.mxu0 0.0
    %v307 = vand.u32 %v41, 4294901760
    %308 = vmatpush.msra.mxu0 %v307
    %v309 = vand.u32 %v76, 4294901760
    %310 = vmatmul.f32.gmra.mxu0 %v309
    %v311 = vpop.f32.mrf.mxu0
    %v312 = vadd.f32 %v278, %v311
    %v313 = vand.u32 %v79, 4294901760
    %314 = vmatmul.f32.gmra.mxu0 %v313
    %v315 = vpop.f32.mrf.mxu0
    %v316 = vadd.f32 %v282, %v315
    %v317 = vand.u32 %v82, 4294901760
    %318 = vmatmul.f32.gmra.mxu0 %v317
    %v319 = vpop.f32.mrf.mxu0
    %v320 = vadd.f32 %v286, %v319
    %v321 = vand.u32 %v85, 4294901760
    %322 = vmatmul.f32.gmra.mxu0 %v321
    %v323 = vpop.f32.mrf.mxu0
    %v324 = vadd.f32 %v290, %v323
    %325 = vdwg.mxu0
    %v326 = vand.u32 2147483647, %v312
    %vm327 = vcmp.le.f32.partialorder %v326, 0.7853982
    %vm328 = vcmp.lt.s32.totalorder %v312, 0
    %v329 = vand.u32 %v312, 2139095040
    %v330 = vshrl.u32 %v329, 23
    %v331 = vsub.s32 %v330, 127
    %v332 = vand.u32 2147483647, %v312
    %v333 = vand.u32 %v332, 8388607
    %v334 = vor.u32 %v333, 8388608
    %v335 = vsub.s32 0, %v334
    %v336 = vadd.s32 %v331, 1
    %vm337 = vcmp.gt.s32.totalorder %v336, 0
    %v338 = vsel %vm337, %v336, 0
    %v339 = vshrl.u32 %v338, 5
    %v340 = vand.u32 %v338, 31
    %v341 = vsub.s32 32, %v340
    %v342 = vshrl.u32 683565275, %v341
    %v343 = vshll.u32 683565275, %v340
    %v344 = vshrl.u32 2475754826, %v341
    %v345 = vor.u32 %v343, %v344
    %v346 = vshll.u32 2475754826, %v340
    %v347 = vshrl.u32 2131351028, %v341
    %v348 = vor.u32 %v346, %v347
    %v349 = vshll.u32 2131351028, %v340
    %v350 = vshrl.u32 2102212464, %v341
    %v351 = vor.u32 %v349, %v350
    %v352 = vshll.u32 2102212464, %v340
    %v353 = vshrl.u32 920167782, %v341
    %v354 = vor.u32 %v352, %v353
    %v355 = vshll.u32 920167782, %v340
    %v356 = vshrl.u32 1326507024, %v341
    %v357 = vor.u32 %v355, %v356
    %vm358 = vcmp.lt.s32.totalorder %v339, 1
    %vm359 = vcmp.lt.s32.totalorder %v339, 2
    %vm360 = vcmp.lt.s32.totalorder %v339, 3
    %vm361 = vcmp.lt.s32.totalorder %v339, 4
    %v362 = vsel %vm358, %v342, %v345
    %v363 = vsel %vm361, %v351, 2102212464
    %v364 = vsel %vm360, %v348, %v363
    %v365 = vsel %vm359, %v362, %v364
    %v366 = vsel %vm358, %v345, %v348
    %v367 = vsel %vm361, %v354, 920167782
    %v368 = vsel %vm360, %v351, %v367
    %v369 = vsel %vm359, %v366, %v368
    %v370 = vsel %vm358, %v348, %v351
    %v371 = vsel %vm361, %v357, 1326507024
    %v372 = vsel %vm360, %v354, %v371
    %v373 = vsel %vm359, %v370, %v372
    %v374 = vshll.u32 %v334, 8
    %v375 = vand.u32 %v374, 65535
    %v376 = vshrl.u32 %v374, 16
    %v377 = vand.u32 %v373, 65535
    %v378 = vshrl.u32 %v373, 16
    %v379 = vmul.u32 %v375, %v377
    %v380 = vmul.u32 %v375, %v378
    %v381 = vmul.u32 %v376, %v377
    %v382 = vmul.u32 %v376, %v378
    %v383 = vshll.u32 %v380, 16
    %v384 = vshrl.u32 %v380, 16
    %v385 = vshll.u32 %v381, 16
    %v386 = vshrl.u32 %v381, 16
    %vm387 = vc.u32 %v379, %v383
    %v388 = vsel %vm387, 1, 0
    %v389 = vadd.s32 %v379, %v383
    %v390 = vadd.s32 %v382, %v388
    %vm391 = vc.u32 %v389, %v385
    %v392 = vsel %vm391, 1, 0
    %v393 = vadd.s32 %v389, %v385
    %v394 = vadd.s32 %v390, %v392
    %v395 = vadd.s32 %v394, %v384
    %v396 = vadd.s32 %v395, %v386
    %v397 = vand.u32 %v374, 65535
    %v398 = vshrl.u32 %v374, 16
    %v399 = vand.u32 %v369, 65535
    %v400 = vshrl.u32 %v369, 16
    %v401 = vmul.u32 %v397, %v399
    %v402 = vmul.u32 %v397, %v400
    %v403 = vmul.u32 %v398, %v399
    %v404 = vmul.u32 %v398, %v400
    %v405 = vshll.u32 %v402, 16
    %v406 = vshrl.u32 %v402, 16
    %v407 = vshll.u32 %v403, 16
    %v408 = vshrl.u32 %v403, 16
    %vm409 = vc.u32 %v401, %v405
    %v410 = vsel %vm409, 1, 0
    %v411 = vadd.s32 %v401, %v405
    %v412 = vadd.s32 %v404, %v410
    %vm413 = vc.u32 %v411, %v407
    %v414 = vsel %vm413, 1, 0
    %v415 = vadd.s32 %v411, %v407
    %v416 = vadd.s32 %v412, %v414
    %v417 = vadd.s32 %v416, %v406
    %v418 = vadd.s32 %v417, %v408
    %v419 = vmul.u32 %v374, %v365
    %v420 = vadd.s32 %v396, %v415
    %vm421 = vc.u32 %v396, %v415
    %v422 = vadd.s32 %v418, 1
    %v423 = vsel %vm421, %v422, %v418
    %v424 = vadd.s32 %v419, %v423
    %v425 = vadd.s32 %v424, 536870912
    %v426 = vshrl.u32 %v425, 30
    %v427 = vshll.u32 %v426, 30
    %v428 = vsub.s32 %v424, %v427
    %vm429 = vcmp.lt.s32.totalorder %v428, 0
    %v430 = vsub.s32 0, %v428
    %v431 = vsel %vm429, %v430, %v428
    %v432 = vclz %v431
    %v433 = vsub.s32 %v432, 2
    %vm434 = vcmp.gt.s32.totalorder 0, %v433
    %v435 = vsel %vm434, 0, %v433
    %v436 = vsub.s32 32, %v435
    %v437 = vshll.u32 %v428, %v435
    %v438 = vshrl.u32 %v420, %v436
    %v439 = vor.u32 %v437, %v438
    %v440 = vsub.s32 4294967266, %v435
    %v441 = vadd.s32 %v440, 127
    %v442 = vshll.u32 %v441, 23
    %v443 = vor.u32 4788187, %v442
    %v444 = vand.u32 2147483647, %v443
    %v446 = vcvt.s32.f32 %v439
    %v447 = vmul.f32 %v446, %v444
    %v448 = vxor.u32 %v447, 2147483648
    %v449 = vsel %vm328, %v448, %v447
    %v450 = vsub.s32 4, %v426
    %v451 = vsel %vm328, %v450, %v426
    %v452 = vsel %vm327, %v312, %v449
    %v453 = vsel %vm327, 0, %v451
    %v454 = vmul.f32 %v452, %v452
    %v455 = vmul.f32 %v454, -0.001358992
    %v456 = vadd.f32 %v455, 0.041655596
    %v457 = vmul.f32 %v454, %v456
    %v458 = vadd.f32 %v457, -0.4999988
    %v459 = vmul.f32 %v454, %v458
    %v460 = vadd.f32 1.0, %v459
    %v461 = vmul.f32 %v452, %v452
    %v462 = vmul.f32 %v461, -0.00019511016
    %v463 = vadd.f32 %v462, 0.008332121
    %v464 = vmul.f32 %v461, %v463
    %v465 = vadd.f32 %v464, -0.16666654
    %v466 = vmul.f32 %v461, %v465
    %v467 = vadd.f32 %v466, 1.0
    %v468 = vmul.f32 %v467, %v452
    %vm469 = vweird.f32 %v312
    %v470 = vand.u32 %v453, 3
    %vm471 = vcmp.lt.s32.totalorder %v470, 2
    %vm472 = vcmp.eq.s32.totalorder %v470, 0
    %v473 = vxor.u32 %v468, 2147483648
    %v474 = vsel %vm472, %v460, %v473
    %vm475 = vcmp.eq.s32.totalorder %v470, 2
    %v476 = vxor.u32 %v460, 2147483648
    %v477 = vsel %vm475, %v476, %v468
    %v478 = vsel %vm471, %v474, %v477
    %v479 = vsel %vm469, nan, %v478
    %v480 = vand.u32 2147483647, %v316
    %vm481 = vcmp.le.f32.partialorder %v480, 0.7853982
    %vm482 = vcmp.lt.s32.totalorder %v316, 0
    %v483 = vand.u32 %v316, 2139095040
    %v484 = vshrl.u32 %v483, 23
    %v485 = vsub.s32 %v484, 127
    %v486 = vand.u32 2147483647, %v316
    %v487 = vand.u32 %v486, 8388607
    %v488 = vor.u32 %v487, 8388608
    %v489 = vsub.s32 0, %v488
    %v490 = vadd.s32 %v485, 1
    %vm491 = vcmp.gt.s32.totalorder %v490, 0
    %v492 = vsel %vm491, %v490, 0
    %v493 = vshrl.u32 %v492, 5
    %v494 = vand.u32 %v492, 31
    %v495 = vsub.s32 32, %v494
    %v496 = vshrl.u32 683565275, %v495
    %v497 = vshll.u32 683565275, %v494
    %v498 = vshrl.u32 2475754826, %v495
    %v499 = vor.u32 %v497, %v498
    %v500 = vshll.u32 2475754826, %v494
    %v501 = vshrl.u32 2131351028, %v495
    %v502 = vor.u32 %v500, %v501
    %v503 = vshll.u32 2131351028, %v494
    %v504 = vshrl.u32 2102212464, %v495
    %v505 = vor.u32 %v503, %v504
    %v506 = vshll.u32 2102212464, %v494
    %v507 = vshrl.u32 920167782, %v495
    %v508 = vor.u32 %v506, %v507
    %v509 = vshll.u32 920167782, %v494
    %v510 = vshrl.u32 1326507024, %v495
    %v511 = vor.u32 %v509, %v510
    %vm512 = vcmp.lt.s32.totalorder %v493, 1
    %vm513 = vcmp.lt.s32.totalorder %v493, 2
    %vm514 = vcmp.lt.s32.totalorder %v493, 3
    %vm515 = vcmp.lt.s32.totalorder %v493, 4
    %v516 = vsel %vm512, %v496, %v499
    %v517 = vsel %vm515, %v505, 2102212464
    %v518 = vsel %vm514, %v502, %v517
    %v519 = vsel %vm513, %v516, %v518
    %v520 = vsel %vm512, %v499, %v502
    %v521 = vsel %vm515, %v508, 920167782
    %v522 = vsel %vm514, %v505, %v521
    %v523 = vsel %vm513, %v520, %v522
    %v524 = vsel %vm512, %v502, %v505
    %v525 = vsel %vm515, %v511, 1326507024
    %v526 = vsel %vm514, %v508, %v525
    %v527 = vsel %vm513, %v524, %v526
    %v528 = vshll.u32 %v488, 8
    %v529 = vand.u32 %v528, 65535
    %v530 = vshrl.u32 %v528, 16
    %v531 = vand.u32 %v527, 65535
    %v532 = vshrl.u32 %v527, 16
    %v533 = vmul.u32 %v529, %v531
    %v534 = vmul.u32 %v529, %v532
    %v535 = vmul.u32 %v530, %v531
    %v536 = vmul.u32 %v530, %v532
    %v537 = vshll.u32 %v534, 16
    %v538 = vshrl.u32 %v534, 16
    %v539 = vshll.u32 %v535, 16
    %v540 = vshrl.u32 %v535, 16
    %vm541 = vc.u32 %v533, %v537
    %v542 = vsel %vm541, 1, 0
    %v543 = vadd.s32 %v533, %v537
    %v544 = vadd.s32 %v536, %v542
    %vm545 = vc.u32 %v543, %v539
    %v546 = vsel %vm545, 1, 0
    %v547 = vadd.s32 %v543, %v539
    %v548 = vadd.s32 %v544, %v546
    %v549 = vadd.s32 %v548, %v538
    %v550 = vadd.s32 %v549, %v540
    %v551 = vand.u32 %v528, 65535
    %v552 = vshrl.u32 %v528, 16
    %v553 = vand.u32 %v523, 65535
    %v554 = vshrl.u32 %v523, 16
    %v555 = vmul.u32 %v551, %v553
    %v556 = vmul.u32 %v551, %v554
    %v557 = vmul.u32 %v552, %v553
    %v558 = vmul.u32 %v552, %v554
    %v559 = vshll.u32 %v556, 16
    %v560 = vshrl.u32 %v556, 16
    %v561 = vshll.u32 %v557, 16
    %v562 = vshrl.u32 %v557, 16
    %vm563 = vc.u32 %v555, %v559
    %v564 = vsel %vm563, 1, 0
    %v565 = vadd.s32 %v555, %v559
    %v566 = vadd.s32 %v558, %v564
    %vm567 = vc.u32 %v565, %v561
    %v568 = vsel %vm567, 1, 0
    %v569 = vadd.s32 %v565, %v561
    %v570 = vadd.s32 %v566, %v568
    %v571 = vadd.s32 %v570, %v560
    %v572 = vadd.s32 %v571, %v562
    %v573 = vmul.u32 %v528, %v519
    %v574 = vadd.s32 %v550, %v569
    %vm575 = vc.u32 %v550, %v569
    %v576 = vadd.s32 %v572, 1
    %v577 = vsel %vm575, %v576, %v572
    %v578 = vadd.s32 %v573, %v577
    %v579 = vadd.s32 %v578, 536870912
    %v580 = vshrl.u32 %v579, 30
    %v581 = vshll.u32 %v580, 30
    %v582 = vsub.s32 %v578, %v581
    %vm583 = vcmp.lt.s32.totalorder %v582, 0
    %v584 = vsub.s32 0, %v582
    %v585 = vsel %vm583, %v584, %v582
    %v586 = vclz %v585
    %v587 = vsub.s32 %v586, 2
    %vm588 = vcmp.gt.s32.totalorder 0, %v587
    %v589 = vsel %vm588, 0, %v587
    %v590 = vsub.s32 32, %v589
    %v591 = vshll.u32 %v582, %v589
    %v592 = vshrl.u32 %v574, %v590
    %v593 = vor.u32 %v591, %v592
    %v594 = vsub.s32 4294967266, %v589
    %v595 = vadd.s32 %v594, 127
    %v596 = vshll.u32 %v595, 23
    %v597 = vor.u32 4788187, %v596
    %v598 = vand.u32 2147483647, %v597
    %v600 = vcvt.s32.f32 %v593
    %v601 = vmul.f32 %v600, %v598
    %v602 = vxor.u32 %v601, 2147483648
    %v603 = vsel %vm482, %v602, %v601
    %v604 = vsub.s32 4, %v580
    %v605 = vsel %vm482, %v604, %v580
    %v606 = vsel %vm481, %v316, %v603
    %v607 = vsel %vm481, 0, %v605
    %v608 = vmul.f32 %v606, %v606
    %v609 = vmul.f32 %v608, -0.001358992
    %v610 = vadd.f32 %v609, 0.041655596
    %v611 = vmul.f32 %v608, %v610
    %v612 = vadd.f32 %v611, -0.4999988
    %v613 = vmul.f32 %v608, %v612
    %v614 = vadd.f32 1.0, %v613
    %v615 = vmul.f32 %v606, %v606
    %v616 = vmul.f32 %v615, -0.00019511016
    %v617 = vadd.f32 %v616, 0.008332121
    %v618 = vmul.f32 %v615, %v617
    %v619 = vadd.f32 %v618, -0.16666654
    %v620 = vmul.f32 %v615, %v619
    %v621 = vadd.f32 %v620, 1.0
    %v622 = vmul.f32 %v621, %v606
    %vm623 = vweird.f32 %v316
    %v624 = vand.u32 %v607, 3
    %vm625 = vcmp.lt.s32.totalorder %v624, 2
    %vm626 = vcmp.eq.s32.totalorder %v624, 0
    %v627 = vxor.u32 %v622, 2147483648
    %v628 = vsel %vm626, %v614, %v627
    %vm629 = vcmp.eq.s32.totalorder %v624, 2
    %v630 = vxor.u32 %v614, 2147483648
    %v631 = vsel %vm629, %v630, %v622
    %v632 = vsel %vm625, %v628, %v631
    %v633 = vsel %vm623, nan, %v632
    %v634 = vand.u32 2147483647, %v320
    %vm635 = vcmp.le.f32.partialorder %v634, 0.7853982
    %vm636 = vcmp.lt.s32.totalorder %v320, 0
    %v637 = vand.u32 %v320, 2139095040
    %v638 = vshrl.u32 %v637, 23
    %v639 = vsub.s32 %v638, 127
    %v640 = vand.u32 2147483647, %v320
    %v641 = vand.u32 %v640, 8388607
    %v642 = vor.u32 %v641, 8388608
    %v643 = vsub.s32 0, %v642
    %v644 = vadd.s32 %v639, 1
    %vm645 = vcmp.gt.s32.totalorder %v644, 0
    %v646 = vsel %vm645, %v644, 0
    %v647 = vshrl.u32 %v646, 5
    %v648 = vand.u32 %v646, 31
    %v649 = vsub.s32 32, %v648
    %v650 = vshrl.u32 683565275, %v649
    %v651 = vshll.u32 683565275, %v648
    %v652 = vshrl.u32 2475754826, %v649
    %v653 = vor.u32 %v651, %v652
    %v654 = vshll.u32 2475754826, %v648
    %v655 = vshrl.u32 2131351028, %v649
    %v656 = vor.u32 %v654, %v655
    %v657 = vshll.u32 2131351028, %v648
    %v658 = vshrl.u32 2102212464, %v649
    %v659 = vor.u32 %v657, %v658
    %v660 = vshll.u32 2102212464, %v648
    %v661 = vshrl.u32 920167782, %v649
    %v662 = vor.u32 %v660, %v661
    %v663 = vshll.u32 920167782, %v648
    %v664 = vshrl.u32 1326507024, %v649
    %v665 = vor.u32 %v663, %v664
    %vm666 = vcmp.lt.s32.totalorder %v647, 1
    %vm667 = vcmp.lt.s32.totalorder %v647, 2
    %vm668 = vcmp.lt.s32.totalorder %v647, 3
    %vm669 = vcmp.lt.s32.totalorder %v647, 4
    %v670 = vsel %vm666, %v650, %v653
    %v671 = vsel %vm669, %v659, 2102212464
    %v672 = vsel %vm668, %v656, %v671
    %v673 = vsel %vm667, %v670, %v672
    %v674 = vsel %vm666, %v653, %v656
    %v675 = vsel %vm669, %v662, 920167782
    %v676 = vsel %vm668, %v659, %v675
    %v677 = vsel %vm667, %v674, %v676
    %v678 = vsel %vm666, %v656, %v659
    %v679 = vsel %vm669, %v665, 1326507024
    %v680 = vsel %vm668, %v662, %v679
    %v681 = vsel %vm667, %v678, %v680
    %v682 = vshll.u32 %v642, 8
    %v683 = vand.u32 %v682, 65535
    %v684 = vshrl.u32 %v682, 16
    %v685 = vand.u32 %v681, 65535
    %v686 = vshrl.u32 %v681, 16
    %v687 = vmul.u32 %v683, %v685
    %v688 = vmul.u32 %v683, %v686
    %v689 = vmul.u32 %v684, %v685
    %v690 = vmul.u32 %v684, %v686
    %v691 = vshll.u32 %v688, 16
    %v692 = vshrl.u32 %v688, 16
    %v693 = vshll.u32 %v689, 16
    %v694 = vshrl.u32 %v689, 16
    %vm695 = vc.u32 %v687, %v691
    %v696 = vsel %vm695, 1, 0
    %v697 = vadd.s32 %v687, %v691
    %v698 = vadd.s32 %v690, %v696
    %vm699 = vc.u32 %v697, %v693
    %v700 = vsel %vm699, 1, 0
    %v701 = vadd.s32 %v697, %v693
    %v702 = vadd.s32 %v698, %v700
    %v703 = vadd.s32 %v702, %v692
    %v704 = vadd.s32 %v703, %v694
    %v705 = vand.u32 %v682, 65535
    %v706 = vshrl.u32 %v682, 16
    %v707 = vand.u32 %v677, 65535
    %v708 = vshrl.u32 %v677, 16
    %v709 = vmul.u32 %v705, %v707
    %v710 = vmul.u32 %v705, %v708
    %v711 = vmul.u32 %v706, %v707
    %v712 = vmul.u32 %v706, %v708
    %v713 = vshll.u32 %v710, 16
    %v714 = vshrl.u32 %v710, 16
    %v715 = vshll.u32 %v711, 16
    %v716 = vshrl.u32 %v711, 16
    %vm717 = vc.u32 %v709, %v713
    %v718 = vsel %vm717, 1, 0
    %v719 = vadd.s32 %v709, %v713
    %v720 = vadd.s32 %v712, %v718
    %vm721 = vc.u32 %v719, %v715
    %v722 = vsel %vm721, 1, 0
    %v723 = vadd.s32 %v719, %v715
    %v724 = vadd.s32 %v720, %v722
    %v725 = vadd.s32 %v724, %v714
    %v726 = vadd.s32 %v725, %v716
    %v727 = vmul.u32 %v682, %v673
    %v728 = vadd.s32 %v704, %v723
    %vm729 = vc.u32 %v704, %v723
    %v730 = vadd.s32 %v726, 1
    %v731 = vsel %vm729, %v730, %v726
    %v732 = vadd.s32 %v727, %v731
    %v733 = vadd.s32 %v732, 536870912
    %v734 = vshrl.u32 %v733, 30
    %v735 = vshll.u32 %v734, 30
    %v736 = vsub.s32 %v732, %v735
    %vm737 = vcmp.lt.s32.totalorder %v736, 0
    %v738 = vsub.s32 0, %v736
    %v739 = vsel %vm737, %v738, %v736
    %v740 = vclz %v739
    %v741 = vsub.s32 %v740, 2
    %vm742 = vcmp.gt.s32.totalorder 0, %v741
    %v743 = vsel %vm742, 0, %v741
    %v744 = vsub.s32 32, %v743
    %v745 = vshll.u32 %v736, %v743
    %v746 = vshrl.u32 %v728, %v744
    %v747 = vor.u32 %v745, %v746
    %v748 = vsub.s32 4294967266, %v743
    %v749 = vadd.s32 %v748, 127
    %v750 = vshll.u32 %v749, 23
    %v751 = vor.u32 4788187, %v750
    %v752 = vand.u32 2147483647, %v751
    %v754 = vcvt.s32.f32 %v747
    %v755 = vmul.f32 %v754, %v752
    %v756 = vxor.u32 %v755, 2147483648
    %v757 = vsel %vm636, %v756, %v755
    %v758 = vsub.s32 4, %v734
    %v759 = vsel %vm636, %v758, %v734
    %v760 = vsel %vm635, %v320, %v757
    %v761 = vsel %vm635, 0, %v759
    %v762 = vmul.f32 %v760, %v760
    %v763 = vmul.f32 %v762, -0.001358992
    %v764 = vadd.f32 %v763, 0.041655596
    %v765 = vmul.f32 %v762, %v764
    %v766 = vadd.f32 %v765, -0.4999988
    %v767 = vmul.f32 %v762, %v766
    %v768 = vadd.f32 1.0, %v767
    %v769 = vmul.f32 %v760, %v760
    %v770 = vmul.f32 %v769, -0.00019511016
    %v771 = vadd.f32 %v770, 0.008332121
    %v772 = vmul.f32 %v769, %v771
    %v773 = vadd.f32 %v772, -0.16666654
    %v774 = vmul.f32 %v769, %v773
    %v775 = vadd.f32 %v774, 1.0
    %v776 = vmul.f32 %v775, %v760
    %vm777 = vweird.f32 %v320
    %v778 = vand.u32 %v761, 3
    %vm779 = vcmp.lt.s32.totalorder %v778, 2
    %vm780 = vcmp.eq.s32.totalorder %v778, 0
    %v781 = vxor.u32 %v776, 2147483648
    %v782 = vsel %vm780, %v768, %v781
    %vm783 = vcmp.eq.s32.totalorder %v778, 2
    %v784 = vxor.u32 %v768, 2147483648
    %v785 = vsel %vm783, %v784, %v776
    %v786 = vsel %vm779, %v782, %v785
    %v787 = vsel %vm777, nan, %v786
    %v788 = vand.u32 2147483647, %v324
    %vm789 = vcmp.le.f32.partialorder %v788, 0.7853982
    %vm790 = vcmp.lt.s32.totalorder %v324, 0
    %v791 = vand.u32 %v324, 2139095040
    %v792 = vshrl.u32 %v791, 23
    %v793 = vsub.s32 %v792, 127
    %v794 = vand.u32 2147483647, %v324
    %v795 = vand.u32 %v794, 8388607
    %v796 = vor.u32 %v795, 8388608
    %v797 = vsub.s32 0, %v796
    %v798 = vadd.s32 %v793, 1
    %vm799 = vcmp.gt.s32.totalorder %v798, 0
    %v800 = vsel %vm799, %v798, 0
    %v801 = vshrl.u32 %v800, 5
    %v802 = vand.u32 %v800, 31
    %v803 = vsub.s32 32, %v802
    %v804 = vshrl.u32 683565275, %v803
    %v805 = vshll.u32 683565275, %v802
    %v806 = vshrl.u32 2475754826, %v803
    %v807 = vor.u32 %v805, %v806
    %v808 = vshll.u32 2475754826, %v802
    %v809 = vshrl.u32 2131351028, %v803
    %v810 = vor.u32 %v808, %v809
    %v811 = vshll.u32 2131351028, %v802
    %v812 = vshrl.u32 2102212464, %v803
    %v813 = vor.u32 %v811, %v812
    %v814 = vshll.u32 2102212464, %v802
    %v815 = vshrl.u32 920167782, %v803
    %v816 = vor.u32 %v814, %v815
    %v817 = vshll.u32 920167782, %v802
    %v818 = vshrl.u32 1326507024, %v803
    %v819 = vor.u32 %v817, %v818
    %vm820 = vcmp.lt.s32.totalorder %v801, 1
    %vm821 = vcmp.lt.s32.totalorder %v801, 2
    %vm822 = vcmp.lt.s32.totalorder %v801, 3
    %vm823 = vcmp.lt.s32.totalorder %v801, 4
    %v824 = vsel %vm820, %v804, %v807
    %v825 = vsel %vm823, %v813, 2102212464
    %v826 = vsel %vm822, %v810, %v825
    %v827 = vsel %vm821, %v824, %v826
    %v828 = vsel %vm820, %v807, %v810
    %v829 = vsel %vm823, %v816, 920167782
    %v830 = vsel %vm822, %v813, %v829
    %v831 = vsel %vm821, %v828, %v830
    %v832 = vsel %vm820, %v810, %v813
    %v833 = vsel %vm823, %v819, 1326507024
    %v834 = vsel %vm822, %v816, %v833
    %v835 = vsel %vm821, %v832, %v834
    %v836 = vshll.u32 %v796, 8
    %v837 = vand.u32 %v836, 65535
    %v838 = vshrl.u32 %v836, 16
    %v839 = vand.u32 %v835, 65535
    %v840 = vshrl.u32 %v835, 16
    %v841 = vmul.u32 %v837, %v839
    %v842 = vmul.u32 %v837, %v840
    %v843 = vmul.u32 %v838, %v839
    %v844 = vmul.u32 %v838, %v840
    %v845 = vshll.u32 %v842, 16
    %v846 = vshrl.u32 %v842, 16
    %v847 = vshll.u32 %v843, 16
    %v848 = vshrl.u32 %v843, 16
    %vm849 = vc.u32 %v841, %v845
    %v850 = vsel %vm849, 1, 0
    %v851 = vadd.s32 %v841, %v845
    %v852 = vadd.s32 %v844, %v850
    %vm853 = vc.u32 %v851, %v847
    %v854 = vsel %vm853, 1, 0
    %v855 = vadd.s32 %v851, %v847
    %v856 = vadd.s32 %v852, %v854
    %v857 = vadd.s32 %v856, %v846
    %v858 = vadd.s32 %v857, %v848
    %v859 = vand.u32 %v836, 65535
    %v860 = vshrl.u32 %v836, 16
    %v861 = vand.u32 %v831, 65535
    %v862 = vshrl.u32 %v831, 16
    %v863 = vmul.u32 %v859, %v861
    %v864 = vmul.u32 %v859, %v862
    %v865 = vmul.u32 %v860, %v861
    %v866 = vmul.u32 %v860, %v862
    %v867 = vshll.u32 %v864, 16
    %v868 = vshrl.u32 %v864, 16
    %v869 = vshll.u32 %v865, 16
    %v870 = vshrl.u32 %v865, 16
    %vm871 = vc.u32 %v863, %v867
    %v872 = vsel %vm871, 1, 0
    %v873 = vadd.s32 %v863, %v867
    %v874 = vadd.s32 %v866, %v872
    %vm875 = vc.u32 %v873, %v869
    %v876 = vsel %vm875, 1, 0
    %v877 = vadd.s32 %v873, %v869
    %v878 = vadd.s32 %v874, %v876
    %v879 = vadd.s32 %v878, %v868
    %v880 = vadd.s32 %v879, %v870
    %v881 = vmul.u32 %v836, %v827
    %v882 = vadd.s32 %v858, %v877
    %vm883 = vc.u32 %v858, %v877
    %v884 = vadd.s32 %v880, 1
    %v885 = vsel %vm883, %v884, %v880
    %v886 = vadd.s32 %v881, %v885
    %v887 = vadd.s32 %v886, 536870912
    %v888 = vshrl.u32 %v887, 30
    %v889 = vshll.u32 %v888, 30
    %v890 = vsub.s32 %v886, %v889
    %vm891 = vcmp.lt.s32.totalorder %v890, 0
    %v892 = vsub.s32 0, %v890
    %v893 = vsel %vm891, %v892, %v890
    %v894 = vclz %v893
    %v895 = vsub.s32 %v894, 2
    %vm896 = vcmp.gt.s32.totalorder 0, %v895
    %v897 = vsel %vm896, 0, %v895
    %v898 = vsub.s32 32, %v897
    %v899 = vshll.u32 %v890, %v897
    %v900 = vshrl.u32 %v882, %v898
    %v901 = vor.u32 %v899, %v900
    %v902 = vsub.s32 4294967266, %v897
    %v903 = vadd.s32 %v902, 127
    %v904 = vshll.u32 %v903, 23
    %v905 = vor.u32 4788187, %v904
    %v906 = vand.u32 2147483647, %v905
    %v908 = vcvt.s32.f32 %v901
    %v909 = vmul.f32 %v908, %v906
    %v910 = vxor.u32 %v909, 2147483648
    %v911 = vsel %vm790, %v910, %v909
    %v912 = vsub.s32 4, %v888
    %v913 = vsel %vm790, %v912, %v888
    %v914 = vsel %vm789, %v324, %v911
    %v915 = vsel %vm789, 0, %v913
    %v916 = vmul.f32 %v914, %v914
    %v917 = vmul.f32 %v916, -0.001358992
    %v918 = vadd.f32 %v917, 0.041655596
    %v919 = vmul.f32 %v916, %v918
    %v920 = vadd.f32 %v919, -0.4999988
    %v921 = vmul.f32 %v916, %v920
    %v922 = vadd.f32 1.0, %v921
    %v923 = vmul.f32 %v914, %v914
    %v924 = vmul.f32 %v923, -0.00019511016
    %v925 = vadd.f32 %v924, 0.008332121
    %v926 = vmul.f32 %v923, %v925
    %v927 = vadd.f32 %v926, -0.16666654
    %v928 = vmul.f32 %v923, %v927
    %v929 = vadd.f32 %v928, 1.0
    %v930 = vmul.f32 %v929, %v914
    %vm931 = vweird.f32 %v324
    %v932 = vand.u32 %v915, 3
    %vm933 = vcmp.lt.s32.totalorder %v932, 2
    %vm934 = vcmp.eq.s32.totalorder %v932, 0
    %v935 = vxor.u32 %v930, 2147483648
    %v936 = vsel %vm934, %v922, %v935
    %vm937 = vcmp.eq.s32.totalorder %v932, 2
    %v938 = vxor.u32 %v922, 2147483648
    %v939 = vsel %vm937, %v938, %v930
    %v940 = vsel %vm933, %v936, %v939
    %v941 = vsel %vm931, nan, %v940
    %942 = vst [vmem:[#allocation7] sm:$0xff] %v479
    %943 = vst [vmem:[#allocation7 + $0x8] sm:$0xff] %v633
    %944 = vst [vmem:[#allocation7 + $0x10] sm:$0xff] %v787
    %945 = vst [vmem:[#allocation7 + $0x18] sm:$0xff] %v941
    // Predicated region
    $region18: #{tpu_custom_call.1} parent=1 // pred_check
      _
    $region19: #{tpu_custom_call.1} parent=1 // pred_check_branch
      %947 = sbr.rel (0) target = $region21
    $region20: #{tpu_custom_call.1} parent=1 // pred_region
      %949 = vsyncadd [#allocation4], 0
      %s950 = sshll.u32 [#allocation7], 4
      %s951 = int_to_ptr.vmem [resolvable:$true] %s950
      %s952 = sshll.u32 %s2, 4
      %s953 = int_to_ptr.hbm [resolvable:$true] %s952
      %958 = dma.vmem_to_hbm [thread:$0]  %s951, 512, %s953, [#allocation4], 128, 128, 8
    $region21: #{tpu_custom_call.1} parent=1 // pred_fallthru
      _
    // Predicated region
    $region22: #{tpu_custom_call.1} parent=1 // pred_check
      _
    $region23: #{tpu_custom_call.1} parent=1 // pred_check_branch
      %960 = sbr.rel (0) target = $region25
    $region24: #{tpu_custom_call.1} parent=1 // pred_region
      %962 = dma.done [#allocation4], 512
    $region25: #{tpu_custom_call.1} parent=1 // pred_fallthru
      _
    %963 = vsyncpa [#allocation3], 1
    %964 = vsyncpa [#allocation6], 1
    %965 = vsyncpa [#allocation4], 1

</llo_original>
